<compile_context>
chip_gen: v7x
topology: tpu7x:2x2x1
jax: 0.10.0
libtpu: 0.0.40
codegen_flags: <defaults>
</compile_context>

<pallas_src>
import functools

import numpy as np
import jax
import jax.numpy as jnp
from jax import lax
from jax.experimental import pallas as pl
from jax.experimental.pallas import tpu as pltpu


# ----------------------------------------------------------------------------
# Triplet selector (deterministic host glue). Mirrors AllTripletSelector.
# TODO(synk): hard / semi-hard negative mining selectors are not implemented.
# ----------------------------------------------------------------------------
def all_triplets(labels_np: np.ndarray) -> np.ndarray:
    labels_np = np.asarray(labels_np)
    trips = []
    n = len(labels_np)
    for a in range(n):
        for p in range(n):
            if p == a or labels_np[p] != labels_np[a]:
                continue
            for neg in range(n):
                if labels_np[neg] == labels_np[a]:
                    continue
                trips.append((a, p, neg))
    return np.asarray(trips, dtype=np.int32)


def _round_up(x: int, m: int) -> int:
    return ((x + m - 1) // m) * m


# ----------------------------------------------------------------------------
# Pallas kernel.
#   idx_ref : (3, TB) int32      -- rows: anchor / positive / negative indices
#   embt_ref: (D_pad, N_pad) f32 -- zero-padded, transposed embeddings (resident)
#   out_ref : (1, 1) f32 SMEM    -- mean loss (written on last step only)
#   acc_ref : (1, TB) f32 VMEM   -- per-lane running loss accumulator
# ----------------------------------------------------------------------------
def _triplet_loss_kernel(idx_ref, embt_ref, out_ref, acc_ref, *,
                         margin, num_triplets, block_t):
    i = pl.program_id(0)

    @pl.when(i == 0)
    def _init():
        acc_ref[...] = jnp.zeros_like(acc_ref)

    n_pad = embt_ref.shape[1]

    a_idx = idx_ref[0:1, :]          # (1, TB) int32
    p_idx = idx_ref[1:2, :]
    n_idx = idx_ref[2:3, :]

    # One-hot *difference* selection matrices (N_pad, TB):
    #   column t of sel_ap is onehot(a_t) - onehot(p_t), so the MXU produces
    #   e_a - e_p directly (gather + subtract fused into one matmul).
    row_ids = lax.broadcasted_iota(jnp.int32, (n_pad, block_t), 0)
    oh_a = (row_ids == a_idx).astype(jnp.float32)
    sel_ap = oh_a - (row_ids == p_idx).astype(jnp.float32)
    sel_an = oh_a - (row_ids == n_idx).astype(jnp.float32)

    emb_t = embt_ref[...]                                    # (D_pad, N_pad)
    dap = jnp.dot(emb_t, sel_ap, preferred_element_type=jnp.float32)  # e_a-e_p
    dan = jnp.dot(emb_t, sel_an, preferred_element_type=jnp.float32)  # e_a-e_n

    # Squared L2 distances per triplet, reduced over the (sublane) D axis.
    ap = jnp.sum(dap * dap, axis=0, keepdims=True)           # (1, TB)
    an = jnp.sum(dan * dan, axis=0, keepdims=True)           # (1, TB)

    # Hinge + mask of padded triplets (global index >= T).
    lane = lax.broadcasted_iota(jnp.int32, (1, block_t), 1)
    valid = (i * block_t + lane) < num_triplets
    losses = jnp.maximum(ap - an + jnp.float32(margin), jnp.float32(0.0))
    acc_ref[...] += jnp.where(valid, losses, jnp.float32(0.0))

    # Final scalar mean only on the last step (1/T multiply, no divide).
    @pl.when(i == pl.num_programs(0) - 1)
    def _finalize():
        out_ref[0, 0] = jnp.sum(acc_ref[...]) * jnp.float32(1.0 / num_triplets)


def online_triplet_loss(embeddings: jax.Array, triplets: jax.Array,
                        margin: float, *, block_t: int = 512):
    """Returns (mean_loss, num_triplets) — same semantics as the PyTorch module."""
    num_triplets = int(triplets.shape[0])
    if num_triplets == 0:
        # torch: mean of an empty tensor is NaN.
        return jnp.float32(float("nan")), 0

    n, d = embeddings.shape
    n_pad = _round_up(max(n, 8), 8)          # sublane multiple
    d_pad = _round_up(max(d, 128), 128)      # lane multiple on the MXU input
    # Lane-dense triplet block, clamped so tiny problems don't over-pad.
    block_t = max(128, min(_round_up(block_t, 128),
                           _round_up(num_triplets, 128)))
    t_pad = _round_up(num_triplets, block_t)
    num_blocks = t_pad // block_t

    # Zero-padded, transposed embeddings: (D_pad, N_pad), f32.
    emb_t = jnp.zeros((d_pad, n_pad), jnp.float32)
    emb_t = emb_t.at[:d, :n].set(embeddings.astype(jnp.float32).T)

    # Triplet indices as (3, T_pad) int32 (pad with index 0; masked in-kernel).
    idx = jnp.zeros((3, t_pad), jnp.int32)
    idx = idx.at[:, :num_triplets].set(triplets.astype(jnp.int32).T)

    kernel = functools.partial(
        _triplet_loss_kernel,
        margin=float(margin),
        num_triplets=num_triplets,
        block_t=block_t,
    )

    mean_loss = pl.pallas_call(
        kernel,
        out_shape=jax.ShapeDtypeStruct((1, 1), jnp.float32),
        grid_spec=pltpu.PrefetchScalarGridSpec(
            num_scalar_prefetch=0,
            grid=(num_blocks,),
            in_specs=[
                # triplet indices: blocked along the lane (triplet) axis.
                pl.BlockSpec((3, block_t), lambda i: (0, i)),
                # transposed embeddings: resident across the whole grid.
                pl.BlockSpec((d_pad, n_pad), lambda i: (0, 0)),
            ],
            out_specs=pl.BlockSpec(memory_space=pltpu.MemorySpace.SMEM),
            scratch_shapes=[pltpu.VMEM((1, block_t), jnp.float32)],
        ),
        compiler_params=pltpu.CompilerParams(
            dimension_semantics=("arbitrary",),   # reduction over triplet blocks
        ),
    )(idx, emb_t)
    return mean_loss[0, 0], num_triplets


# Pure-JAX reference (matches the PyTorch forward pass exactly).
def reference_loss(embeddings, triplets, margin):
    ea = embeddings[triplets[:, 0]]
    ep = embeddings[triplets[:, 1]]
    en = embeddings[triplets[:, 2]]
    ap = jnp.sum((ea - ep) ** 2, axis=1)
    an = jnp.sum((ea - en) ** 2, axis=1)
    losses = jnp.maximum(ap - an + margin, 0.0)
    return jnp.mean(losses), triplets.shape[0]


if __name__ == "__main__":
    key = jax.random.PRNGKey(0)
    N, D = 12, 32                      # 12 embeddings (3 classes x 4), dim 32
    margin = 1.0

    embeddings = jax.random.normal(key, (N, D), dtype=jnp.float32)
    labels = np.array([0] * 4 + [1] * 4 + [2] * 4, dtype=np.int32)

    triplets_np = all_triplets(labels)                 # (288, 3)
    triplets = jnp.asarray(triplets_np, dtype=jnp.int32)

    # block_t=128 -> 3 grid steps, exercises the multi-block accumulator path.
    loss, n_trips = online_triplet_loss(embeddings, triplets, margin,
                                        block_t=128)
    loss = jax.block_until_ready(loss)

    ref_loss, ref_n = reference_loss(embeddings, triplets, margin)
    np.testing.assert_allclose(np.asarray(loss), np.asarray(ref_loss),
                               rtol=1e-5, atol=1e-5)
    assert n_trips == ref_n

    print("KERNEL_OK")
</pallas_src>

<mosaic_0001>
module attributes {stable_mosaic.version = 11 : i64} {
  func.func @_triplet_loss_kernel(%arg0: i32, %arg1: memref<3x128xi32, #tpu.memory_space<vmem>>, %arg2: memref<128x16xf32, #tpu.memory_space<vmem>>, %arg3: memref<1x1xf32, #tpu.memory_space<smem>>, %arg4: memref<1x128xf32, #tpu.memory_space<vmem>>) attributes {dimension_semantics = [#tpu.dimension_semantics<arbitrary>], iteration_bounds = array<i64: 3>, scalar_prefetch = 0 : i64, scratch_operands = 1 : i64, tpu.core_type = #tpu.core_type<tc>, window_params = [{transform_indices = @transform_0, window_bounds = array<i64: 3, 128>}, {pipeline_mode = #tpu.pipeline_mode<synchronous>, transform_indices = @transform_1, window_bounds = array<i64: 128, 16>}, {transform_indices = @transform_2, window_bounds = array<i64: 1, 1>}]} {
    %c0_i32 = arith.constant 0 : i32
    %0 = arith.cmpi eq, %arg0, %c0_i32 : i32
    %1 = arith.extui %0 : i1 to i32
    %c0_i32_0 = arith.constant 0 : i32
    %2 = arith.cmpi ne, %1, %c0_i32_0 : i32
    scf.if %2 {
      %cst_17 = arith.constant 0.000000e+00 : f32
      %49 = vector.broadcast %cst_17 : f32 to vector<1x128xf32>
      %c0_18 = arith.constant 0 : index
      %c0_19 = arith.constant 0 : index
      %50 = vector.load %arg4[%c0_18, %c0_19] : memref<1x128xf32, #tpu.memory_space<vmem>>, vector<1x128xf32>
      tpu.vector_store %arg4[%c0_18, %c0_19], %49 {strides = array<i32>} : memref<1x128xf32, #tpu.memory_space<vmem>>, vector<1x128xf32>,
    } else {
    }
    %c0 = arith.constant 0 : index
    %c0_1 = arith.constant 0 : index
    %3 = vector.load %arg1[%c0, %c0_1] : memref<3x128xi32, #tpu.memory_space<vmem>>, vector<1x128xi32>
    %c1 = arith.constant 1 : index
    %c0_2 = arith.constant 0 : index
    %4 = vector.load %arg1[%c1, %c0_2] : memref<3x128xi32, #tpu.memory_space<vmem>>, vector<1x128xi32>
    %c2 = arith.constant 2 : index
    %c0_3 = arith.constant 0 : index
    %5 = vector.load %arg1[%c2, %c0_3] : memref<3x128xi32, #tpu.memory_space<vmem>>, vector<1x128xi32>
    %6 = tpu.iota {dimensions = array<i32: 0>} : vector<16x128xi32>
    %7 = vector.broadcast %3 : vector<1x128xi32> to vector<16x128xi32>
    %8 = arith.cmpi eq, %6, %7 : vector<16x128xi32>
    %9 = arith.extui %8 : vector<16x128xi1> to vector<16x128xi32>
    %10 = arith.sitofp %9 : vector<16x128xi32> to vector<16x128xf32>
    %11 = vector.broadcast %4 : vector<1x128xi32> to vector<16x128xi32>
    %12 = arith.cmpi eq, %6, %11 : vector<16x128xi32>
    %13 = arith.extui %12 : vector<16x128xi1> to vector<16x128xi32>
    %14 = arith.sitofp %13 : vector<16x128xi32> to vector<16x128xf32>
    %15 = arith.subf %10, %14 : vector<16x128xf32>
    %16 = vector.broadcast %5 : vector<1x128xi32> to vector<16x128xi32>
    %17 = arith.cmpi eq, %6, %16 : vector<16x128xi32>
    %18 = arith.extui %17 : vector<16x128xi1> to vector<16x128xi32>
    %19 = arith.sitofp %18 : vector<16x128xi32> to vector<16x128xf32>
    %20 = arith.subf %10, %19 : vector<16x128xf32>
    %c0_4 = arith.constant 0 : index
    %c0_5 = arith.constant 0 : index
    %21 = vector.load %arg2[%c0_4, %c0_5] : memref<128x16xf32, #tpu.memory_space<vmem>>, vector<128x16xf32>
    %cst = arith.constant dense<0.000000e+00> : vector<128x128xf32>
    %22 = tpu.matmul %21, %15, %cst {dimension_numbers = #tpu.dot_dimension_numbers<[1], [0], [0], [1], [0, 0, 1, 1], [], []>} : vector<128x16xf32>, vector<16x128xf32>, vector<128x128xf32> -> vector<128x128xf32>
    %cst_6 = arith.constant dense<0.000000e+00> : vector<128x128xf32>
    %23 = tpu.matmul %21, %20, %cst_6 {dimension_numbers = #tpu.dot_dimension_numbers<[1], [0], [0], [1], [0, 0, 1, 1], [], []>} : vector<128x16xf32>, vector<16x128xf32>, vector<128x128xf32> -> vector<128x128xf32>
    %24 = arith.mulf %22, %22 : vector<128x128xf32>
    %cst_7 = arith.constant dense<0.000000e+00> : vector<128xf32>
    %25 = vector.multi_reduction <add>, %24, %cst_7 [0] : vector<128x128xf32> to vector<128xf32>
    %26 = vector.shape_cast %25 : vector<128xf32> to vector<1x128xf32>
    %27 = arith.mulf %23, %23 : vector<128x128xf32>
    %cst_8 = arith.constant dense<0.000000e+00> : vector<128xf32>
    %28 = vector.multi_reduction <add>, %27, %cst_8 [0] : vector<128x128xf32> to vector<128xf32>
    %29 = vector.shape_cast %28 : vector<128xf32> to vector<1x128xf32>
    %30 = tpu.iota {dimensions = array<i32: 1>} : vector<1x128xi32>
    %c128_i32 = arith.constant 128 : i32
    %31 = arith.muli %arg0, %c128_i32 : i32
    %32 = vector.broadcast %31 : i32 to vector<1x128xi32>
    %33 = arith.addi %32, %30 : vector<1x128xi32>
    %c288_i32 = arith.constant 288 : i32
    %34 = vector.broadcast %c288_i32 : i32 to vector<1x128xi32>
    %35 = arith.cmpi slt, %33, %34 : vector<1x128xi32>
    %36 = arith.subf %26, %29 : vector<1x128xf32>
    %cst_9 = arith.constant 1.000000e+00 : f32
    %37 = vector.broadcast %cst_9 : f32 to vector<1x128xf32>
    %38 = arith.addf %36, %37 : vector<1x128xf32>
    %cst_10 = arith.constant 0.000000e+00 : f32
    %39 = vector.broadcast %cst_10 : f32 to vector<1x128xf32>
    %40 = arith.maximumf %38, %39 : vector<1x128xf32>
    %c0_11 = arith.constant 0 : index
    %c0_12 = arith.constant 0 : index
    %41 = vector.load %arg4[%c0_11, %c0_12] : memref<1x128xf32, #tpu.memory_space<vmem>>, vector<1x128xf32>
    %cst_13 = arith.constant 0.000000e+00 : f32
    %42 = vector.broadcast %cst_13 : f32 to vector<1x128xf32>
    %43 = arith.select %35, %40, %42 : vector<1x128xi1>, vector<1x128xf32>
    %44 = arith.addf %41, %43 : vector<1x128xf32>
    %c0_14 = arith.constant 0 : index
    %c0_15 = arith.constant 0 : index
    %45 = vector.load %arg4[%c0_14, %c0_15] : memref<1x128xf32, #tpu.memory_space<vmem>>, vector<1x128xf32>
    tpu.vector_store %arg4[%c0_14, %c0_15], %44 {strides = array<i32>} : memref<1x128xf32, #tpu.memory_space<vmem>>, vector<1x128xf32>,
    %c2_i32 = arith.constant 2 : i32
    %46 = arith.cmpi eq, %arg0, %c2_i32 : i32
    %47 = arith.extui %46 : i1 to i32
    %c0_i32_16 = arith.constant 0 : i32
    %48 = arith.cmpi ne, %47, %c0_i32_16 : i32
    scf.if %48 {
      %c0_17 = arith.constant 0 : index
      %c0_18 = arith.constant 0 : index
      %49 = vector.load %arg4[%c0_17, %c0_18] : memref<1x128xf32, #tpu.memory_space<vmem>>, vector<1x128xf32>
      %50 = vector.shape_cast %49 : vector<1x128xf32> to vector<1x1x128xf32>
      %cst_19 = arith.constant dense<0.000000e+00> : vector<1xf32>
      %51 = vector.multi_reduction <add>, %50, %cst_19 [1, 2] : vector<1x1x128xf32> to vector<1xf32>
      %52 = vector.shape_cast %51 : vector<1xf32> to vector<1x1x1xf32>
      %53 = vector.extract %52[0, 0, 0] : f32 from vector<1x1x1xf32>
      %cst_20 = arith.constant 0.00347222225 : f32
      %54 = arith.mulf %53, %cst_20 : f32
      %c0_21 = arith.constant 0 : index
      %c0_22 = arith.constant 0 : index
      %55 = memref.load %arg3[%c0_21, %c0_22] : memref<1x1xf32, #tpu.memory_space<smem>>
      memref.store %54, %arg3[%c0_21, %c0_22] : memref<1x1xf32, #tpu.memory_space<smem>>
    } else {
    }
    return
  }
  func.func @transform_0(%arg0: i32) -> (i32, i32) {
    %c0_i32 = arith.constant 0 : i32
    %c0_i32_0 = arith.constant 0 : i32
    return %c0_i32, %arg0 : i32, i32
  }
  func.func @transform_1(%arg0: i32) -> (i32, i32) {
    %c0_i32 = arith.constant 0 : i32
    %c0_i32_0 = arith.constant 0 : i32
    %c0_i32_1 = arith.constant 0 : i32
    return %c0_i32, %c0_i32_0 : i32, i32
  }
  func.func @transform_2(%arg0: i32) -> (i32, i32) {
    %c0_i32 = arith.constant 0 : i32
    %c0_i32_0 = arith.constant 0 : i32
    %c0_i32_1 = arith.constant 0 : i32
    return %c0_i32, %c0_i32_0 : i32, i32
  }
}

</mosaic_0001>

<llo_original>
// kernel: tpu_custom_call.1
$region0: #{tpu_custom_call.1}
  #allocation0 [shape = 'u32[]', space=smem, size = 0x4, offset = 0x4, fixed_abs, tag = 'smem constant byte address 0x4 - core index']
  #allocation1 [shape = 'u32[144,128]{1,0:T(1,128)}', space=vmem, size = 0x12000, scoped, tag = 'internal scratch']
  #allocation2 [shape = 'f32[1,128]{1,0:T(1,128)}', space=vmem, size = 0x200, scoped, tag = 'scratch operand']
  %s0 = inlined_call_operand.vmem [shape: s32[3,384], index: 0, kind: input, shape index: {}]
  %s1 = inlined_call_operand.vmem [shape: f32[128,16], index: 1, kind: input, shape index: {}]
  %s2 = inlined_call_operand.hbm [shape: f32[1,1], index: 2, kind: output, shape index: {}]
  %s3 = sld [smem:[#allocation0]]
  $region49: #{tpu_custom_call.1} parent=0
    _
  %s5 = ssub.s32 1, %s3
  %s6 = scalar_select 0, %s5, %s3
  $region1: #{tpu_custom_call.1} parent=0
    #allocation3 [shape = 'u8[512]{0}', space=smem, size = 0x200, scoped, tag = 'output window, operand 0, single buffered']
    #allocation4 [shape = 's32[2]{0}', space=sflag, size = 0x8, scoped, tag = 'scoped memory for tpu_custom_call.1']
    %7 = vsyncpa [#allocation4], 0
    loop: start=0, step=1, limit=5
    $region2: #{tpu_custom_call.1} parent=1 // loop_pre_header
      _
    $region3: #{tpu_custom_call.1} parent=1 // loop_header
      %s9 = sphi 0, %s13
      %p10 = scmp.ge.s32.totalorder %s9, 5
      %s19 = sphi 0, %s21
      %s22 = sphi 0, %s19
      %s23 = sphi 0, %s22
      %s39 = sphi 0, %s23
      %s43 = sphi 0, %s43
      %s45 = sphi 0, %s43
      %s46 = sphi 0, %s45
      %s60 = sphi 0, %s46
      %s64 = sphi 0, %s64
      %s66 = sphi 0, %s64
      %s67 = sphi 0, %s66
      %s81 = sphi 0, %s67
    $region4: #{tpu_custom_call.1} parent=1 // loop_header_branch
      %12 = sbr.rel (%p10) target = $region8
    $region5: #{tpu_custom_call.1} parent=1 // loop_body
      %s14 = ssub.s32 %s9, 1
      %s15 = ssub.s32 %s9, 2
      %s16 = sadd.s32 %s9, 1
      %s17 = ssub.s32 %s9, %s16
      %p18 = scmp.eq.s32.totalorder %s17, 0
      %s20 = sadd.s32 %s19, 1
      %s21 = scalar_select %p18, %s19, %s20
      %p24 = pneg %p18
      %p25 = scmp.eq.s32.totalorder %s9, 2
      %p26 = por %p24, %p25
      %p27 = scmp.ne.s32.totalorder %s19, %s22
      %p28 = scmp.eq.s32.totalorder %s9, 0
      %p29 = por %p27, %p28
      %p30 = scmp.ne.s32.totalorder %s19, %s22
      %p31 = scmp.eq.s32.totalorder %s14, 2
      %p32 = por %p30, %p31
      %p33 = scmp.ne.s32.totalorder %s22, %s23
      %p34 = scmp.eq.s32.totalorder %s14, 0
      %p35 = por %p33, %p34
      %p36 = scmp.ne.s32.totalorder %s22, %s23
      %p37 = scmp.eq.s32.totalorder %s15, 2
      %p38 = por %p36, %p37
      %p40 = scmp.ne.s32.totalorder %s23, %s39
      %p41 = scmp.eq.s32.totalorder %s15, 0
      %p42 = por %p40, %p41
      %s44 = sadd.s32 %s43, 1
      %p47 = scmp.eq.s32.totalorder %s9, 2
      %p48 = scmp.ne.s32.totalorder %s43, %s45
      %p49 = scmp.eq.s32.totalorder %s9, 0
      %p50 = por %p48, %p49
      %p51 = scmp.ne.s32.totalorder %s43, %s45
      %p52 = scmp.eq.s32.totalorder %s14, 2
      %p53 = por %p51, %p52
      %p54 = scmp.ne.s32.totalorder %s45, %s46
      %p55 = scmp.eq.s32.totalorder %s14, 0
      %p56 = por %p54, %p55
      %p57 = scmp.ne.s32.totalorder %s45, %s46
      %p58 = scmp.eq.s32.totalorder %s15, 2
      %p59 = por %p57, %p58
      %p61 = scmp.ne.s32.totalorder %s46, %s60
      %p62 = scmp.eq.s32.totalorder %s15, 0
      %p63 = por %p61, %p62
      %s65 = sadd.s32 %s64, 1
      %p68 = scmp.eq.s32.totalorder %s9, 2
      %p69 = scmp.ne.s32.totalorder %s64, %s66
      %p70 = scmp.eq.s32.totalorder %s9, 0
      %p71 = por %p69, %p70
      %p72 = scmp.ne.s32.totalorder %s64, %s66
      %p73 = scmp.eq.s32.totalorder %s14, 2
      %p74 = por %p72, %p73
      %p75 = scmp.ne.s32.totalorder %s66, %s67
      %p76 = scmp.eq.s32.totalorder %s14, 0
      %p77 = por %p75, %p76
      %p78 = scmp.ne.s32.totalorder %s66, %s67
      %p79 = scmp.eq.s32.totalorder %s15, 2
      %p80 = por %p78, %p79
      %p82 = scmp.ne.s32.totalorder %s67, %s81
      %p83 = scmp.eq.s32.totalorder %s15, 0
      %p84 = por %p82, %p83
      %p85 = scmp.le.s32.totalorder 1, %s9
      %p86 = scmp.lt.s32.totalorder %s9, 4
      %p87 = pnand %p85, %p86
      %p88 = pneg %p87
      // Predicated region
      $region9: #{tpu_custom_call.1} parent=5 // pred_check
        _
      $region10: #{tpu_custom_call.1} parent=5 // pred_check_branch
        %90 = sbr.rel (%p87) target = $region12
      $region11: #{tpu_custom_call.1} parent=5 // pred_region
        %s91 = ssub.s32 %s9, 1
        // Predicated region
        $region13: #{tpu_custom_call.1} parent=11 // pred_check
          %p92 = pneg %p56
        $region14: #{tpu_custom_call.1} parent=11 // pred_check_branch
          %94 = sbr.rel (%p92) target = $region16
        $region15: #{tpu_custom_call.1} parent=11 // pred_region
          _
        $region16: #{tpu_custom_call.1} parent=11 // pred_fallthru
          _
      $region12: #{tpu_custom_call.1} parent=5 // pred_fallthru
        _
      %p95 = scmp.lt.s32.totalorder %s9, 3
      // Predicated region
      $region17: #{tpu_custom_call.1} parent=5 // pred_check
        %p96 = pneg %p95
      $region18: #{tpu_custom_call.1} parent=5 // pred_check_branch
        %98 = sbr.rel (%p96) target = $region20
      $region19: #{tpu_custom_call.1} parent=5 // pred_region
        // Predicated region
        $region21: #{tpu_custom_call.1} parent=19 // pred_check
          %p99 = pneg %p29
        $region22: #{tpu_custom_call.1} parent=19 // pred_check_branch
          %101 = sbr.rel (%p99) target = $region24
        $region23: #{tpu_custom_call.1} parent=19 // pred_region
          %p102 = scmp.lt.s32.totalorder %s9, 2
          %s103 = scalar_select %p102, %s9, 2
          %s104 = smul.addr %s103, 4
          %s105 = scalar_lea.vmem %s0, %s104
        $region24: #{tpu_custom_call.1} parent=19 // pred_fallthru
          _
      $region20: #{tpu_custom_call.1} parent=5 // pred_fallthru
        _
      %p106 = scmp.le.s32.totalorder 1, %s9
      %p107 = scmp.lt.s32.totalorder %s9, 4
      %p108 = pnand %p106, %p107
      %p109 = pneg %p108
      // Predicated region
      $region25: #{tpu_custom_call.1} parent=5 // pred_check
        _
      $region26: #{tpu_custom_call.1} parent=5 // pred_check_branch
        %111 = sbr.rel (%p108) target = $region28
      $region27: #{tpu_custom_call.1} parent=5 // pred_region
        %s112 = ssub.s32 %s9, 1
        %p113 = scmp.lt.s32.totalorder %s14, 2
        %s114 = scalar_select %p113, %s14, 2
        %s115 = smul.addr %s114, 4
        %s116 = scalar_lea.vmem %s0, %s115
        %p117 = pneg %p35
        %p118 = pneg %p32
        %p119 = pneg %p56
        %p120 = pneg %p53
        %p121 = pneg %p77
        %p122 = pneg %p74
        %p123 = scmp.lt.s32.totalorder %s14, 2
        %s124 = scalar_select %p123, %s14, 2
        %s125 = smul.addr %s124, 4
        %s126 = scalar_lea.vmem %s0, %s125
        %p127 = scmp.eq.s32.totalorder %s14, 0
        // Predicated region
        $region29: #{tpu_custom_call.1} parent=27 // pred_check
          %p128 = pneg %p127
        $region30: #{tpu_custom_call.1} parent=27 // pred_check_branch
          %130 = sbr.rel (%p128) target = $region32
        $region31: #{tpu_custom_call.1} parent=27 // pred_region
          %131 = vst [vmem:[#allocation2] sm:$0x1] 0.0
        $region32: #{tpu_custom_call.1} parent=27 // pred_fallthru
          _
        %v132 = vld [vmem:[%s126] sm:$0x1]
        %v133 = vld [vmem:[%s126 + $0x1] sm:$0x1]
        %v134 = vld [vmem:[%s126 + $0x2] sm:$0x1]
        %v135 = vlaneseq
        %v136 = vshrl.u32 %v135, 7
        %v137 = vadd.s32 %v136, 8
        %v138 = vlaneseq
        %v139 = vshrl.u32 %v138, 7
        %v140 = vsub.s32 0, %v139
        %v141 = vrot.slane %v132, %v140
        %vm142 = vcmp.eq.s32.totalorder %v136, %v141
        %vm143 = vcmp.eq.s32.totalorder %v137, %v141
        %v144 = vsel %vm142, 1, 0
        %v145 = vsel %vm143, 1, 0
        %v146 = vcvt.s32.f32 %v144
        %v147 = vcvt.s32.f32 %v145
        %v148 = vlaneseq
        %v149 = vshrl.u32 %v148, 7
        %v150 = vsub.s32 0, %v149
        %v151 = vrot.slane %v133, %v150
        %vm152 = vcmp.eq.s32.totalorder %v136, %v151
        %vm153 = vcmp.eq.s32.totalorder %v137, %v151
        %v154 = vsel %vm152, 1, 0
        %v155 = vsel %vm153, 1, 0
        %v156 = vcvt.s32.f32 %v154
        %v157 = vcvt.s32.f32 %v155
        %v158 = vsub.f32 %v146, %v156
        %v159 = vsub.f32 %v147, %v157
        %v160 = vlaneseq
        %v161 = vshrl.u32 %v160, 7
        %v162 = vsub.s32 0, %v161
        %v163 = vrot.slane %v134, %v162
        %vm164 = vcmp.eq.s32.totalorder %v136, %v163
        %vm165 = vcmp.eq.s32.totalorder %v137, %v163
        %v166 = vsel %vm164, 1, 0
        %v167 = vsel %vm165, 1, 0
        %v168 = vcvt.s32.f32 %v166
        %v169 = vcvt.s32.f32 %v167
        %v170 = vsub.f32 %v146, %v168
        %v171 = vsub.f32 %v147, %v169
        %v172 = vld [vmem:[%s1] sm:$0xff]
        %v173 = vld [vmem:[%s1 + $0x8] sm:$0xff]
        %v174 = vld [vmem:[%s1 + $0x10] sm:$0xff]
        %v175 = vld [vmem:[%s1 + $0x18] sm:$0xff]
        %v176 = vld [vmem:[%s1 + $0x20] sm:$0xff]
        %v177 = vld [vmem:[%s1 + $0x28] sm:$0xff]
        %v178 = vld [vmem:[%s1 + $0x30] sm:$0xff]
        %v179 = vld [vmem:[%s1 + $0x38] sm:$0xff]
        %v180 = vld [vmem:[%s1 + $0x40] sm:$0xff]
        %v181 = vld [vmem:[%s1 + $0x48] sm:$0xff]
        %v182 = vld [vmem:[%s1 + $0x50] sm:$0xff]
        %v183 = vld [vmem:[%s1 + $0x58] sm:$0xff]
        %v184 = vld [vmem:[%s1 + $0x60] sm:$0xff]
        %v185 = vld [vmem:[%s1 + $0x68] sm:$0xff]
        %v186 = vld [vmem:[%s1 + $0x70] sm:$0xff]
        %v187 = vld [vmem:[%s1 + $0x78] sm:$0xff]
        %vm188 = vcmask 130048
        %v190 = vsel %vm188, %v172, 0
        %v193 = vsel %vm188, %v173, 0
        %v196 = vsel %vm188, %v174, 0
        %v199 = vsel %vm188, %v175, 0
        %v202 = vsel %vm188, %v176, 0
        %v205 = vsel %vm188, %v177, 0
        %v208 = vsel %vm188, %v178, 0
        %v211 = vsel %vm188, %v179, 0
        %v214 = vsel %vm188, %v180, 0
        %v217 = vsel %vm188, %v181, 0
        %v220 = vsel %vm188, %v182, 0
        %v223 = vsel %vm188, %v183, 0
        %v226 = vsel %vm188, %v184, 0
        %v229 = vsel %vm188, %v185, 0
        %v232 = vsel %vm188, %v186, 0
        %v235 = vsel %vm188, %v187, 0
        %237 = vmatprep.subr.mxu0 0.0
        %238 = vmatpush1.msra.mxu0 %v158
        %239 = vmatprep.subr.mxu0 0.0
        %240 = vmatpush1.msra.mxu0 %v159
        %241 = vmatprep.subr.mxu0 0.0
        %242 = vmatpush1.msra.mxu0 0.0
        %243 = vmatprep.subr.mxu0 0.0
        %244 = vmatpush1.msra.mxu0 0.0
        %245 = vmatprep.subr.mxu0 0.0
        %246 = vmatpush1.msra.mxu0 0.0
        %247 = vmatprep.subr.mxu0 0.0
        %248 = vmatpush1.msra.mxu0 0.0
        %249 = vmatprep.subr.mxu0 0.0
        %250 = vmatpush1.msra.mxu0 0.0
        %251 = vmatprep.subr.mxu0 0.0
        %252 = vmatpush1.msra.mxu0 0.0
        %253 = vmatprep.subr.mxu0 0.0
        %254 = vmatpush1.msra.mxu0 0.0
        %255 = vmatprep.subr.mxu0 0.0
        %256 = vmatpush1.msra.mxu0 0.0
        %257 = vmatprep.subr.mxu0 0.0
        %258 = vmatpush1.msra.mxu0 0.0
        %259 = vmatprep.subr.mxu0 0.0
        %260 = vmatpush1.msra.mxu0 0.0
        %261 = vmatprep.subr.mxu0 0.0
        %262 = vmatpush1.msra.mxu0 0.0
        %263 = vmatprep.subr.mxu0 0.0
        %264 = vmatpush1.msra.mxu0 0.0
        %265 = vmatprep.subr.mxu0 0.0
        %266 = vmatpush1.msra.mxu0 0.0
        %267 = vmatprep.subr.mxu0 0.0
        %268 = vmatpush1.msra.mxu0 0.0
        %269 = vmatprep.subr.mxu0 0.0
        %270 = vmatpush1.msra.mxu0 0.0
        %271 = vmatprep.subr.mxu0 0.0
        %272 = vmatpush1.msra.mxu0 0.0
        %273 = vmatprep.subr.mxu0 0.0
        %274 = vmatpush1.msra.mxu0 0.0
        %275 = vmatprep.subr.mxu0 0.0
        %276 = vmatpush1.msra.mxu0 0.0
        %277 = vmatprep.subr.mxu0 0.0
        %278 = vmatpush1.msra.mxu0 0.0
        %279 = vmatprep.subr.mxu0 0.0
        %280 = vmatpush1.msra.mxu0 0.0
        %281 = vmatprep.subr.mxu0 0.0
        %282 = vmatpush1.msra.mxu0 0.0
        %283 = vmatprep.subr.mxu0 0.0
        %284 = vmatpush1.msra.mxu0 0.0
        %285 = vmatprep.subr.mxu0 0.0
        %286 = vmatpush1.msra.mxu0 0.0
        %287 = vmatprep.subr.mxu0 0.0
        %288 = vmatpush1.msra.mxu0 0.0
        %289 = vmatprep.subr.mxu0 0.0
        %290 = vmatpush1.msra.mxu0 0.0
        %291 = vmatprep.subr.mxu0 0.0
        %292 = vmatpush1.msra.mxu0 0.0
        %293 = vmatprep.subr.mxu0 0.0
        %294 = vmatpush1.msra.mxu0 0.0
        %295 = vmatprep.subr.mxu0 0.0
        %296 = vmatpush1.msra.mxu0 0.0
        %297 = vmatprep.subr.mxu0 0.0
        %298 = vmatpush1.msra.mxu0 0.0
        %299 = vmatprep.subr.mxu0 0.0
        %300 = vmatpush1.msra.mxu0 0.0
        %301 = vmatprep.mubr.f32.mxu0 0.0
        %302 = vmatmul.mubr.f32.gmra.mrb[0].mxu0 %v190
        %v303 = vpop.f32.mrb[0].mxu0
        %v304 = vadd.f32 0.0, %v303
        %v305 = vpop.f32.mrb[0].mxu0
        %306 = vmatprep.mubr.f32.mxu0 0.0
        %307 = vmatmul.mubr.f32.gmra.mrb[0].mxu0 %v193
        %v308 = vpop.f32.mrb[0].mxu0
        %v309 = vadd.f32 0.0, %v308
        %v310 = vpop.f32.mrb[0].mxu0
        %311 = vmatprep.mubr.f32.mxu0 0.0
        %312 = vmatmul.mubr.f32.gmra.mrb[0].mxu0 %v196
        %v313 = vpop.f32.mrb[0].mxu0
        %v314 = vadd.f32 0.0, %v313
        %v315 = vpop.f32.mrb[0].mxu0
        %316 = vmatprep.mubr.f32.mxu0 0.0
        %317 = vmatmul.mubr.f32.gmra.mrb[0].mxu0 %v199
        %v318 = vpop.f32.mrb[0].mxu0
        %v319 = vadd.f32 0.0, %v318
        %v320 = vpop.f32.mrb[0].mxu0
        %321 = vmatprep.mubr.f32.mxu0 0.0
        %322 = vmatmul.mubr.f32.gmra.mrb[0].mxu0 %v202
        %v323 = vpop.f32.mrb[0].mxu0
        %v324 = vadd.f32 0.0, %v323
        %v325 = vpop.f32.mrb[0].mxu0
        %326 = vmatprep.mubr.f32.mxu0 0.0
        %327 = vmatmul.mubr.f32.gmra.mrb[0].mxu0 %v205
        %v328 = vpop.f32.mrb[0].mxu0
        %v329 = vadd.f32 0.0, %v328
        %v330 = vpop.f32.mrb[0].mxu0
        %331 = vmatprep.mubr.f32.mxu0 0.0
        %332 = vmatmul.mubr.f32.gmra.mrb[0].mxu0 %v208
        %v333 = vpop.f32.mrb[0].mxu0
        %v334 = vadd.f32 0.0, %v333
        %v335 = vpop.f32.mrb[0].mxu0
        %336 = vmatprep.mubr.f32.mxu0 0.0
        %337 = vmatmul.mubr.f32.gmra.mrb[0].mxu0 %v211
        %v338 = vpop.f32.mrb[0].mxu0
        %v339 = vadd.f32 0.0, %v338
        %v340 = vpop.f32.mrb[0].mxu0
        %341 = vmatprep.mubr.f32.mxu0 0.0
        %342 = vmatmul.mubr.f32.gmra.mrb[0].mxu0 %v214
        %v343 = vpop.f32.mrb[0].mxu0
        %v344 = vadd.f32 0.0, %v343
        %v345 = vpop.f32.mrb[0].mxu0
        %346 = vmatprep.mubr.f32.mxu0 0.0
        %347 = vmatmul.mubr.f32.gmra.mrb[0].mxu0 %v217
        %v348 = vpop.f32.mrb[0].mxu0
        %v349 = vadd.f32 0.0, %v348
        %v350 = vpop.f32.mrb[0].mxu0
        %351 = vmatprep.mubr.f32.mxu0 0.0
        %352 = vmatmul.mubr.f32.gmra.mrb[0].mxu0 %v220
        %v353 = vpop.f32.mrb[0].mxu0
        %v354 = vadd.f32 0.0, %v353
        %v355 = vpop.f32.mrb[0].mxu0
        %356 = vmatprep.mubr.f32.mxu0 0.0
        %357 = vmatmul.mubr.f32.gmra.mrb[0].mxu0 %v223
        %v358 = vpop.f32.mrb[0].mxu0
        %v359 = vadd.f32 0.0, %v358
        %v360 = vpop.f32.mrb[0].mxu0
        %361 = vmatprep.mubr.f32.mxu0 0.0
        %362 = vmatmul.mubr.f32.gmra.mrb[0].mxu0 %v226
        %v363 = vpop.f32.mrb[0].mxu0
        %v364 = vadd.f32 0.0, %v363
        %v365 = vpop.f32.mrb[0].mxu0
        %366 = vmatprep.mubr.f32.mxu0 0.0
        %367 = vmatmul.mubr.f32.gmra.mrb[0].mxu0 %v229
        %v368 = vpop.f32.mrb[0].mxu0
        %v369 = vadd.f32 0.0, %v368
        %v370 = vpop.f32.mrb[0].mxu0
        %371 = vmatprep.mubr.f32.mxu0 0.0
        %372 = vmatmul.mubr.f32.gmra.mrb[0].mxu0 %v232
        %v373 = vpop.f32.mrb[0].mxu0
        %v374 = vadd.f32 0.0, %v373
        %v375 = vpop.f32.mrb[0].mxu0
        %376 = vmatprep.mubr.f32.mxu0 0.0
        %377 = vmatmul.mubr.f32.gmra.mrb[0].mxu0 %v235
        %v378 = vpop.f32.mrb[0].mxu0
        %v379 = vadd.f32 0.0, %v378
        %v380 = vpop.f32.mrb[0].mxu0
        %381 = vdwg.mxu0
        %382 = vmatprep.subr.mxu0 0.0
        %383 = vmatpush1.msra.mxu0 %v170
        %384 = vmatprep.subr.mxu0 0.0
        %385 = vmatpush1.msra.mxu0 %v171
        %386 = vmatprep.subr.mxu0 0.0
        %387 = vmatpush1.msra.mxu0 0.0
        %388 = vmatprep.subr.mxu0 0.0
        %389 = vmatpush1.msra.mxu0 0.0
        %390 = vmatprep.subr.mxu0 0.0
        %391 = vmatpush1.msra.mxu0 0.0
        %392 = vmatprep.subr.mxu0 0.0
        %393 = vmatpush1.msra.mxu0 0.0
        %394 = vmatprep.subr.mxu0 0.0
        %395 = vmatpush1.msra.mxu0 0.0
        %396 = vmatprep.subr.mxu0 0.0
        %397 = vmatpush1.msra.mxu0 0.0
        %398 = vmatprep.subr.mxu0 0.0
        %399 = vmatpush1.msra.mxu0 0.0
        %400 = vmatprep.subr.mxu0 0.0
        %401 = vmatpush1.msra.mxu0 0.0
        %402 = vmatprep.subr.mxu0 0.0
        %403 = vmatpush1.msra.mxu0 0.0
        %404 = vmatprep.subr.mxu0 0.0
        %405 = vmatpush1.msra.mxu0 0.0
        %406 = vmatprep.subr.mxu0 0.0
        %407 = vmatpush1.msra.mxu0 0.0
        %408 = vmatprep.subr.mxu0 0.0
        %409 = vmatpush1.msra.mxu0 0.0
        %410 = vmatprep.subr.mxu0 0.0
        %411 = vmatpush1.msra.mxu0 0.0
        %412 = vmatprep.subr.mxu0 0.0
        %413 = vmatpush1.msra.mxu0 0.0
        %414 = vmatprep.subr.mxu0 0.0
        %415 = vmatpush1.msra.mxu0 0.0
        %416 = vmatprep.subr.mxu0 0.0
        %417 = vmatpush1.msra.mxu0 0.0
        %418 = vmatprep.subr.mxu0 0.0
        %419 = vmatpush1.msra.mxu0 0.0
        %420 = vmatprep.subr.mxu0 0.0
        %421 = vmatpush1.msra.mxu0 0.0
        %422 = vmatprep.subr.mxu0 0.0
        %423 = vmatpush1.msra.mxu0 0.0
        %424 = vmatprep.subr.mxu0 0.0
        %425 = vmatpush1.msra.mxu0 0.0
        %426 = vmatprep.subr.mxu0 0.0
        %427 = vmatpush1.msra.mxu0 0.0
        %428 = vmatprep.subr.mxu0 0.0
        %429 = vmatpush1.msra.mxu0 0.0
        %430 = vmatprep.subr.mxu0 0.0
        %431 = vmatpush1.msra.mxu0 0.0
        %432 = vmatprep.subr.mxu0 0.0
        %433 = vmatpush1.msra.mxu0 0.0
        %434 = vmatprep.subr.mxu0 0.0
        %435 = vmatpush1.msra.mxu0 0.0
        %436 = vmatprep.subr.mxu0 0.0
        %437 = vmatpush1.msra.mxu0 0.0
        %438 = vmatprep.subr.mxu0 0.0
        %439 = vmatpush1.msra.mxu0 0.0
        %440 = vmatprep.subr.mxu0 0.0
        %441 = vmatpush1.msra.mxu0 0.0
        %442 = vmatprep.subr.mxu0 0.0
        %443 = vmatpush1.msra.mxu0 0.0
        %444 = vmatprep.subr.mxu0 0.0
        %445 = vmatpush1.msra.mxu0 0.0
        %446 = vmatprep.mubr.f32.mxu0 0.0
        %447 = vmatmul.mubr.f32.gmra.mrb[0].mxu0 %v190
        %v448 = vpop.f32.mrb[0].mxu0
        %v449 = vadd.f32 0.0, %v448
        %v450 = vpop.f32.mrb[0].mxu0
        %451 = vmatprep.mubr.f32.mxu0 0.0
        %452 = vmatmul.mubr.f32.gmra.mrb[0].mxu0 %v193
        %v453 = vpop.f32.mrb[0].mxu0
        %v454 = vadd.f32 0.0, %v453
        %v455 = vpop.f32.mrb[0].mxu0
        %456 = vmatprep.mubr.f32.mxu0 0.0
        %457 = vmatmul.mubr.f32.gmra.mrb[0].mxu0 %v196
        %v458 = vpop.f32.mrb[0].mxu0
        %v459 = vadd.f32 0.0, %v458
        %v460 = vpop.f32.mrb[0].mxu0
        %461 = vmatprep.mubr.f32.mxu0 0.0
        %462 = vmatmul.mubr.f32.gmra.mrb[0].mxu0 %v199
        %v463 = vpop.f32.mrb[0].mxu0
        %v464 = vadd.f32 0.0, %v463
        %v465 = vpop.f32.mrb[0].mxu0
        %466 = vmatprep.mubr.f32.mxu0 0.0
        %467 = vmatmul.mubr.f32.gmra.mrb[0].mxu0 %v202
        %v468 = vpop.f32.mrb[0].mxu0
        %v469 = vadd.f32 0.0, %v468
        %v470 = vpop.f32.mrb[0].mxu0
        %471 = vmatprep.mubr.f32.mxu0 0.0
        %472 = vmatmul.mubr.f32.gmra.mrb[0].mxu0 %v205
        %v473 = vpop.f32.mrb[0].mxu0
        %v474 = vadd.f32 0.0, %v473
        %v475 = vpop.f32.mrb[0].mxu0
        %476 = vmatprep.mubr.f32.mxu0 0.0
        %477 = vmatmul.mubr.f32.gmra.mrb[0].mxu0 %v208
        %v478 = vpop.f32.mrb[0].mxu0
        %v479 = vadd.f32 0.0, %v478
        %v480 = vpop.f32.mrb[0].mxu0
        %481 = vmatprep.mubr.f32.mxu0 0.0
        %482 = vmatmul.mubr.f32.gmra.mrb[0].mxu0 %v211
        %v483 = vpop.f32.mrb[0].mxu0
        %v484 = vadd.f32 0.0, %v483
        %v485 = vpop.f32.mrb[0].mxu0
        %486 = vmatprep.mubr.f32.mxu0 0.0
        %487 = vmatmul.mubr.f32.gmra.mrb[0].mxu0 %v214
        %v488 = vpop.f32.mrb[0].mxu0
        %v489 = vadd.f32 0.0, %v488
        %v490 = vpop.f32.mrb[0].mxu0
        %491 = vmatprep.mubr.f32.mxu0 0.0
        %492 = vmatmul.mubr.f32.gmra.mrb[0].mxu0 %v217
        %v493 = vpop.f32.mrb[0].mxu0
        %v494 = vadd.f32 0.0, %v493
        %v495 = vpop.f32.mrb[0].mxu0
        %496 = vmatprep.mubr.f32.mxu0 0.0
        %497 = vmatmul.mubr.f32.gmra.mrb[0].mxu0 %v220
        %v498 = vpop.f32.mrb[0].mxu0
        %v499 = vadd.f32 0.0, %v498
        %v500 = vpop.f32.mrb[0].mxu0
        %501 = vmatprep.mubr.f32.mxu0 0.0
        %502 = vmatmul.mubr.f32.gmra.mrb[0].mxu0 %v223
        %v503 = vpop.f32.mrb[0].mxu0
        %v504 = vadd.f32 0.0, %v503
        %v505 = vpop.f32.mrb[0].mxu0
        %506 = vmatprep.mubr.f32.mxu0 0.0
        %507 = vmatmul.mubr.f32.gmra.mrb[0].mxu0 %v226
        %v508 = vpop.f32.mrb[0].mxu0
        %v509 = vadd.f32 0.0, %v508
        %v510 = vpop.f32.mrb[0].mxu0
        %511 = vmatprep.mubr.f32.mxu0 0.0
        %512 = vmatmul.mubr.f32.gmra.mrb[0].mxu0 %v229
        %v513 = vpop.f32.mrb[0].mxu0
        %v514 = vadd.f32 0.0, %v513
        %v515 = vpop.f32.mrb[0].mxu0
        %516 = vmatprep.mubr.f32.mxu0 0.0
        %517 = vmatmul.mubr.f32.gmra.mrb[0].mxu0 %v232
        %v518 = vpop.f32.mrb[0].mxu0
        %v519 = vadd.f32 0.0, %v518
        %v520 = vpop.f32.mrb[0].mxu0
        %521 = vmatprep.mubr.f32.mxu0 0.0
        %522 = vmatmul.mubr.f32.gmra.mrb[0].mxu0 %v235
        %v523 = vpop.f32.mrb[0].mxu0
        %v524 = vadd.f32 0.0, %v523
        %v525 = vpop.f32.mrb[0].mxu0
        %526 = vdwg.mxu0
        %v527 = vmul.f32 %v304, %v304
        %v528 = vmul.f32 %v309, %v309
        %v529 = vmul.f32 %v314, %v314
        %v530 = vmul.f32 %v319, %v319
        %v531 = vmul.f32 %v324, %v324
        %v532 = vmul.f32 %v329, %v329
        %v533 = vmul.f32 %v334, %v334
        %v534 = vmul.f32 %v339, %v339
        %v535 = vmul.f32 %v344, %v344
        %v536 = vmul.f32 %v349, %v349
        %v537 = vmul.f32 %v354, %v354
        %v538 = vmul.f32 %v359, %v359
        %v539 = vmul.f32 %v364, %v364
        %v540 = vmul.f32 %v369, %v369
        %v541 = vmul.f32 %v374, %v374
        %v542 = vmul.f32 %v379, %v379
        %v543 = vadd.f32 %v527, %v528
        %v544 = vadd.f32 %v543, %v529
        %v545 = vadd.f32 %v544, %v530
        %v546 = vadd.f32 %v545, %v531
        %v547 = vadd.f32 %v546, %v532
        %v548 = vadd.f32 %v547, %v533
        %v549 = vadd.f32 %v548, %v534
        %v550 = vadd.f32 %v549, %v535
        %v551 = vadd.f32 %v550, %v536
        %v552 = vadd.f32 %v551, %v537
        %v553 = vadd.f32 %v552, %v538
        %v554 = vadd.f32 %v553, %v539
        %v555 = vadd.f32 %v554, %v540
        %v556 = vadd.f32 %v555, %v541
        %v557 = vadd.f32 %v556, %v542
        %v558 = vrot.slane %v557, 4
        %v559 = vadd.f32 %v557, %v558
        %v560 = vrot.slane %v559, 2
        %v561 = vadd.f32 %v559, %v560
        %v562 = vrot.slane %v561, 1
        %v563 = vadd.f32 %v561, %v562
        %v564 = vmul.f32 %v449, %v449
        %v565 = vmul.f32 %v454, %v454
        %v566 = vmul.f32 %v459, %v459
        %v567 = vmul.f32 %v464, %v464
        %v568 = vmul.f32 %v469, %v469
        %v569 = vmul.f32 %v474, %v474
        %v570 = vmul.f32 %v479, %v479
        %v571 = vmul.f32 %v484, %v484
        %v572 = vmul.f32 %v489, %v489
        %v573 = vmul.f32 %v494, %v494
        %v574 = vmul.f32 %v499, %v499
        %v575 = vmul.f32 %v504, %v504
        %v576 = vmul.f32 %v509, %v509
        %v577 = vmul.f32 %v514, %v514
        %v578 = vmul.f32 %v519, %v519
        %v579 = vmul.f32 %v524, %v524
        %v580 = vadd.f32 %v564, %v565
        %v581 = vadd.f32 %v580, %v566
        %v582 = vadd.f32 %v581, %v567
        %v583 = vadd.f32 %v582, %v568
        %v584 = vadd.f32 %v583, %v569
        %v585 = vadd.f32 %v584, %v570
        %v586 = vadd.f32 %v585, %v571
        %v587 = vadd.f32 %v586, %v572
        %v588 = vadd.f32 %v587, %v573
        %v589 = vadd.f32 %v588, %v574
        %v590 = vadd.f32 %v589, %v575
        %v591 = vadd.f32 %v590, %v576
        %v592 = vadd.f32 %v591, %v577
        %v593 = vadd.f32 %v592, %v578
        %v594 = vadd.f32 %v593, %v579
        %v595 = vrot.slane %v594, 4
        %v596 = vadd.f32 %v594, %v595
        %v597 = vrot.slane %v596, 2
        %v598 = vadd.f32 %v596, %v597
        %v599 = vrot.slane %v598, 1
        %v600 = vadd.f32 %v598, %v599
        %v601 = vlaneseq
        %v602 = vand.u32 %v601, 127
        %s603 = smul.u32 %s14, 128
        %v604 = vstv %s603
        %v605 = vadd.s32 %v604, %v602
        %vm606 = vcmp.lt.s32.totalorder %v605, 288
        %v607 = vsub.f32 %v563, %v600
        %v608 = vadd.f32 %v607, 1.0
        %v609 = vmax.f32 %v608, 0.0
        %v610 = vld [vmem:[#allocation2] sm:$0x1]
        %v611 = vsel %vm606, %v609, 0.0
        %v612 = vadd.f32 %v610, %v611
        %613 = vst [vmem:[#allocation2] sm:$0x1] %v612
        %p614 = scmp.eq.s32.totalorder %s14, 2
        // Predicated region
        $region33: #{tpu_custom_call.1} parent=27 // pred_check
          %p615 = pneg %p614
        $region34: #{tpu_custom_call.1} parent=27 // pred_check_branch
          %617 = sbr.rel (%p615) target = $region36
        $region35: #{tpu_custom_call.1} parent=27 // pred_region
          %v618 = vld [vmem:[#allocation2] sm:$0x1]
          %vm619 = vcmask 1040384
          %v620 = vsel %vm619, %v618, 0.0
          %621 = vadd.xlane.f32.xlu0 %v620
          %v622 = vpop.xlane.xlu0 %621
          %v623 = vrot.slane %v622, 4
          %v624 = vadd.f32 %v622, %v623
          %v625 = vrot.slane %v624, 2
          %v626 = vadd.f32 %v624, %v625
          %v627 = vrot.slane %v626, 1
          %v628 = vadd.f32 %v626, %v627
          %s629 = vtos %v628
          %s630 = smul.f32 %s629, 0.0034722222
          %s631 = scalar_lea.smem [#allocation3], 0
          %632 = sst [smem:[%s631]] %s630
        $region36: #{tpu_custom_call.1} parent=27 // pred_fallthru
          _
        // Predicated region
        $region37: #{tpu_custom_call.1} parent=27 // pred_check
          %p633 = pneg %p74
        $region38: #{tpu_custom_call.1} parent=27 // pred_check_branch
          %635 = sbr.rel (%p633) target = $region40
        $region39: #{tpu_custom_call.1} parent=27 // pred_region
          %s637 = ssub.s32 16, 16
          %638 = vsyncadd [#allocation4], %s637
          %641 = dma.smem_to_hbm [#allocation3], 16, %s2, [#allocation4]
        $region40: #{tpu_custom_call.1} parent=27 // pred_fallthru
          _
        // Predicated region
        $region41: #{tpu_custom_call.1} parent=27 // pred_check
          %p642 = pneg %p74
        $region42: #{tpu_custom_call.1} parent=27 // pred_check_branch
          %644 = sbr.rel (%p642) target = $region44
        $region43: #{tpu_custom_call.1} parent=27 // pred_region
          %645 = dma.done [#allocation4], 16
        $region44: #{tpu_custom_call.1} parent=27 // pred_fallthru
          _
        %646 = sfence
      $region28: #{tpu_custom_call.1} parent=5 // pred_fallthru
        _
      %p647 = scmp.le.s32.totalorder 2, %s9
      // Predicated region
      $region45: #{tpu_custom_call.1} parent=5 // pred_check
        %p648 = pneg %p647
      $region46: #{tpu_custom_call.1} parent=5 // pred_check_branch
        %650 = sbr.rel (%p648) target = $region48
      $region47: #{tpu_custom_call.1} parent=5 // pred_region
        %s651 = ssub.s32 %s9, 2
      $region48: #{tpu_custom_call.1} parent=5 // pred_fallthru
        _
    $region6: #{tpu_custom_call.1} parent=1 // loop_footer
      %s13 = sadd.s32 1, %s9
    $region7: #{tpu_custom_call.1} parent=1 // loop_footer_branch
      %8 = sbr.rel target = $region3
    $region8: #{tpu_custom_call.1} parent=1 // loop_exit
      _
    %652 = vsyncpa [#allocation4], 1
    %s653 = scalar_lea.sflag [#allocation4], 1
    %654 = vsyncpa %s653, 1

</llo_original>
